<compile_context>
chip_gen: v5e
topology: v5e:2x2
jax: 0.10.0
libtpu: 0.0.40
codegen_flags: <defaults>
</compile_context>

<pallas_src>
import jax
import jax.numpy as jnp
from jax.experimental import pallas as pl
from jax.experimental.pallas import tpu as pltpu


def ts_encoder_kernel(x_ref, ts_ref, wpx_ref, weff_ref, beff_ref, o_ref):
    """One row-tile of the projection.

    x_ref   : (TM, F)  rows = flattened (batch, time), features on lanes
    ts_ref  : (TM, 1)  per-row min-max-normalized timestamp
    wpx_ref : (F, H)   projection weight.T rows for the raw features
    weff_ref: (1, H)   folded time-encoding weight  (w_time @ w_proj[F:])
    beff_ref: (1, H)   folded bias                  (b_time @ w_proj[F:] + b_proj)
    o_ref   : (TM, H)
    """
    out = jnp.dot(x_ref[...], wpx_ref[...], preferred_element_type=jnp.float32)
    # Folded time-encoding branch: rank-1 broadcast FMA instead of a second matmul.
    out = out + ts_ref[...] * weff_ref[...] + beff_ref[...]
    o_ref[...] = out.astype(o_ref.dtype)


def ts_encoder_forward(X, timestamps, w_time, b_time, w_proj, b_proj,
                       *, block_rows=512, out_dtype=None):
    """X: (B, F, T), timestamps: (B, T).  Returns (B, T, H).

    w_time: (1, E)   nn.Linear(1, E) weight, stored transposed
    b_time: (1, E)   nn.Linear(1, E) bias
    w_proj: (F+E, H) nn.Linear(F+E, H) weight, stored transposed
    b_proj: (1, H)   nn.Linear(F+E, H) bias
    """
    B, F, T = X.shape
    H = w_proj.shape[1]
    out_dtype = out_dtype if out_dtype is not None else X.dtype

    # --- wrapper-side folding / glue (all on tiny arrays) -------------------
    wpx = w_proj[:F]                               # (F, H)
    wpt = w_proj[F:]                               # (E, H)
    w_eff = w_time @ wpt                           # (1, H)  folded time weight
    b_eff = b_time @ wpt + b_proj                  # (1, H)  folded bias

    # Per-sample min-max norm of timestamps (must be per sample, not per tile).
    tmin = timestamps.min(axis=-1, keepdims=True)
    tmax = timestamps.max(axis=-1, keepdims=True)
    ts_n = (timestamps - tmin) / (tmax - tmin)     # (B, T); matches reference
                                                   # (Inf/NaN if tmax==tmin, as in PyTorch)

    BT = B * T
    x_rows = jnp.swapaxes(X, 1, 2).reshape(BT, F)  # (B*T, F)
    ts_rows = ts_n.reshape(BT, 1)                  # (B*T, 1)

    # Row tile: big enough to amortize per-step overhead, small enough for
    # double-buffered blocks to sit comfortably in v7x's 32 MiB scoped VMEM.
    TM = block_rows if BT >= block_rows else BT
    grid = (pl.cdiv(BT, TM),)

    out = pl.pallas_call(
        ts_encoder_kernel,
        out_shape=jax.ShapeDtypeStruct((BT, H), out_dtype),
        grid=grid,
        in_specs=[
            pl.BlockSpec((TM, F), lambda i: (i, 0)),
            pl.BlockSpec((TM, 1), lambda i: (i, 0)),
            pl.BlockSpec((F, H), lambda i: (0, 0)),
            pl.BlockSpec((1, H), lambda i: (0, 0)),
            pl.BlockSpec((1, H), lambda i: (0, 0)),
        ],
        out_specs=pl.BlockSpec((TM, H), lambda i: (i, 0)),
        compiler_params=pltpu.CompilerParams(
            dimension_semantics=("parallel",)),
    )(x_rows, ts_rows, wpx, w_eff, b_eff)

    return out.reshape(B, T, H)


if __name__ == "__main__":
    key = jax.random.PRNGKey(0)
    B, F, T = 2, 4, 8        # batch, num_features, t_length
    E, H = 4, 32             # time_encoding_size, input_size (projection out)

    k1, k2, k3, k4, k5, k6 = jax.random.split(key, 6)
    X = jax.random.normal(k1, (B, F, T), dtype=jnp.float32)
    timestamps = jax.random.uniform(k2, (B, T), dtype=jnp.float32)

    # time_encoder = nn.Linear(1, E): weight (E,1) -> stored transposed (1,E)
    bnd_t = 1.0                                      # 1/sqrt(fan_in=1)
    w_time = jax.random.uniform(k3, (1, E), jnp.float32, -bnd_t, bnd_t)
    b_time = jax.random.uniform(k4, (1, E), jnp.float32, -bnd_t, bnd_t)

    # projection = nn.Linear(F+E, H): weight (H, F+E) -> stored transposed (F+E, H)
    bnd_p = float(1.0 / (F + E) ** 0.5)
    w_proj = jax.random.uniform(k5, (F + E, H), jnp.float32, -bnd_p, bnd_p)
    b_proj = jax.random.uniform(k6, (1, H), jnp.float32, -bnd_p, bnd_p)

    # block_rows=8 here just to exercise a multi-step grid at this tiny size;
    # real workloads should use the default (>=512).
    out = ts_encoder_forward(X, timestamps, w_time, b_time, w_proj, b_proj,
                             block_rows=8)
    out = jax.block_until_ready(out)

    # Plain-JAX reference of the original (un-folded) forward semantics.
    x_btf = jnp.swapaxes(X, 1, 2)
    tmin = timestamps.min(axis=-1, keepdims=True)
    tmax = timestamps.max(axis=-1, keepdims=True)
    ts_n = (timestamps - tmin) / (tmax - tmin)
    enc = ts_n[..., None] * w_time[0] + b_time[0]
    ref = jnp.concatenate([x_btf, enc], axis=-1) @ w_proj + b_proj[0]

    assert out.shape == (B, T, H)
    assert jnp.allclose(out, ref, atol=1e-4, rtol=1e-4), "mismatch vs reference"
    print("KERNEL_OK")
</pallas_src>

<mosaic_0001>
module attributes {stable_mosaic.version = 11 : i64} {
  func.func @ts_encoder_kernel(%arg0: i32, %arg1: memref<8x4xf32, #tpu.memory_space<vmem>>, %arg2: memref<8x1xf32, #tpu.memory_space<vmem>>, %arg3: memref<4x32xf32, #tpu.memory_space<vmem>>, %arg4: memref<1x32xf32, #tpu.memory_space<vmem>>, %arg5: memref<1x32xf32, #tpu.memory_space<vmem>>, %arg6: memref<8x32xf32, #tpu.memory_space<vmem>>) attributes {dimension_semantics = [#tpu.dimension_semantics<parallel>], iteration_bounds = array<i64: 2>, scalar_prefetch = 0 : i64, scratch_operands = 0 : i64, tpu.core_type = #tpu.core_type<tc>, window_params = [{transform_indices = @transform_0, window_bounds = array<i64: 8, 4>}, {transform_indices = @transform_1, window_bounds = array<i64: 8, 1>}, {pipeline_mode = #tpu.pipeline_mode<synchronous>, transform_indices = @transform_2, window_bounds = array<i64: 4, 32>}, {pipeline_mode = #tpu.pipeline_mode<synchronous>, transform_indices = @transform_3, window_bounds = array<i64: 1, 32>}, {pipeline_mode = #tpu.pipeline_mode<synchronous>, transform_indices = @transform_4, window_bounds = array<i64: 1, 32>}, {transform_indices = @transform_5, window_bounds = array<i64: 8, 32>}]} {
    %c0 = arith.constant 0 : index
    %c0_0 = arith.constant 0 : index
    %0 = vector.load %arg1[%c0, %c0_0] : memref<8x4xf32, #tpu.memory_space<vmem>>, vector<8x4xf32>
    %c0_1 = arith.constant 0 : index
    %c0_2 = arith.constant 0 : index
    %1 = vector.load %arg3[%c0_1, %c0_2] : memref<4x32xf32, #tpu.memory_space<vmem>>, vector<4x32xf32>
    %cst = arith.constant dense<0.000000e+00> : vector<8x32xf32>
    %2 = tpu.matmul %0, %1, %cst {dimension_numbers = #tpu.dot_dimension_numbers<[1], [0], [0], [1], [0, 0, 1, 1], [], []>} : vector<8x4xf32>, vector<4x32xf32>, vector<8x32xf32> -> vector<8x32xf32>
    %c0_3 = arith.constant 0 : index
    %c0_4 = arith.constant 0 : index
    %3 = vector.load %arg2[%c0_3, %c0_4] : memref<8x1xf32, #tpu.memory_space<vmem>>, vector<8x1xf32>
    %c0_5 = arith.constant 0 : index
    %c0_6 = arith.constant 0 : index
    %4 = vector.load %arg4[%c0_5, %c0_6] : memref<1x32xf32, #tpu.memory_space<vmem>>, vector<1x32xf32>
    %5 = vector.broadcast %3 : vector<8x1xf32> to vector<8x32xf32>
    %6 = vector.broadcast %4 : vector<1x32xf32> to vector<8x32xf32>
    %7 = arith.mulf %5, %6 : vector<8x32xf32>
    %8 = arith.addf %2, %7 : vector<8x32xf32>
    %c0_7 = arith.constant 0 : index
    %c0_8 = arith.constant 0 : index
    %9 = vector.load %arg5[%c0_7, %c0_8] : memref<1x32xf32, #tpu.memory_space<vmem>>, vector<1x32xf32>
    %10 = vector.broadcast %9 : vector<1x32xf32> to vector<8x32xf32>
    %11 = arith.addf %8, %10 : vector<8x32xf32>
    %c0_9 = arith.constant 0 : index
    %c0_10 = arith.constant 0 : index
    %12 = vector.load %arg6[%c0_9, %c0_10] : memref<8x32xf32, #tpu.memory_space<vmem>>, vector<8x32xf32>
    tpu.vector_store %arg6[%c0_9, %c0_10], %11 {strides = array<i32>} : memref<8x32xf32, #tpu.memory_space<vmem>>, vector<8x32xf32>,
    return
  }
  func.func @transform_0(%arg0: i32) -> (i32, i32) {
    %c0_i32 = arith.constant 0 : i32
    %c0_i32_0 = arith.constant 0 : i32
    return %arg0, %c0_i32 : i32, i32
  }
  func.func @transform_1(%arg0: i32) -> (i32, i32) {
    %c0_i32 = arith.constant 0 : i32
    %c0_i32_0 = arith.constant 0 : i32
    return %arg0, %c0_i32 : i32, i32
  }
  func.func @transform_2(%arg0: i32) -> (i32, i32) {
    %c0_i32 = arith.constant 0 : i32
    %c0_i32_0 = arith.constant 0 : i32
    %c0_i32_1 = arith.constant 0 : i32
    return %c0_i32, %c0_i32_0 : i32, i32
  }
  func.func @transform_3(%arg0: i32) -> (i32, i32) {
    %c0_i32 = arith.constant 0 : i32
    %c0_i32_0 = arith.constant 0 : i32
    %c0_i32_1 = arith.constant 0 : i32
    return %c0_i32, %c0_i32_0 : i32, i32
  }
  func.func @transform_4(%arg0: i32) -> (i32, i32) {
    %c0_i32 = arith.constant 0 : i32
    %c0_i32_0 = arith.constant 0 : i32
    %c0_i32_1 = arith.constant 0 : i32
    return %c0_i32, %c0_i32_0 : i32, i32
  }
  func.func @transform_5(%arg0: i32) -> (i32, i32) {
    %c0_i32 = arith.constant 0 : i32
    %c0_i32_0 = arith.constant 0 : i32
    return %arg0, %c0_i32 : i32, i32
  }
}

</mosaic_0001>

<llo_original>
// kernel: tpu_custom_call.1
$region0: #{tpu_custom_call.1}
  #allocation0 [shape = 'u32[]', space=smem, size = 0x4, offset = 0x4, fixed_abs, tag = 'smem constant byte address 0x4 - core index']
  #allocation1 [shape = 'u32[72,128]{1,0:T(1,128)}', space=vmem, size = 0x9000, scoped, tag = 'internal scratch']
  %s0 = inlined_call_operand.vmem [shape: f32[16,4], index: 0, kind: input, shape index: {}]
  %s1 = inlined_call_operand.vmem [shape: f32[16,1], index: 1, kind: input, shape index: {}]
  %s2 = inlined_call_operand.vmem [shape: f32[4,32], index: 2, kind: input, shape index: {}]
  %s3 = inlined_call_operand.vmem [shape: f32[1,32], index: 3, kind: input, shape index: {}]
  %s4 = inlined_call_operand.vmem [shape: f32[1,32], index: 4, kind: input, shape index: {}]
  %s5 = inlined_call_operand.hbm [shape: f32[16,32], index: 5, kind: output, shape index: {}]
  %s6 = sld [smem:[#allocation0]]
  $region53: #{tpu_custom_call.1} parent=0
    _
  %s8 = ssub.s32 1, %s6
  %s9 = scalar_select 0, %s8, %s6
  $region1: #{tpu_custom_call.1} parent=0
    #allocation2 [shape = 'u8[8192]{0}', space=vmem, size = 0x2000, scoped, tag = 'output window, operand 0']
    #allocation3 [shape = 's32[2]{0}', space=sflag, size = 0x8, scoped, tag = 'scoped memory for tpu_custom_call.1']
    %10 = vsyncpa [#allocation3], 0
    %s11 = scalar_lea.sflag [#allocation3], 1
    %12 = vsyncpa %s11, 0
    loop: start=0, step=1, limit=4
    $region2: #{tpu_custom_call.1} parent=1 // loop_pre_header
      _
    $region3: #{tpu_custom_call.1} parent=1 // loop_header
      %s14 = sphi 0, %s18
      %p15 = scmp.ge.s32.totalorder %s14, 4
      %s24 = sphi 0, %s26
      %s27 = sphi 0, %s24
      %s28 = sphi 0, %s27
      %s44 = sphi 0, %s28
      %s50 = sphi 0, %s52
      %s53 = sphi 0, %s50
      %s54 = sphi 0, %s53
      %s70 = sphi 0, %s54
      %s74 = sphi 0, %s74
      %s76 = sphi 0, %s74
      %s77 = sphi 0, %s76
      %s91 = sphi 0, %s77
      %s95 = sphi 0, %s95
      %s97 = sphi 0, %s95
      %s98 = sphi 0, %s97
      %s112 = sphi 0, %s98
      %s116 = sphi 0, %s116
      %s118 = sphi 0, %s116
      %s119 = sphi 0, %s118
      %s133 = sphi 0, %s119
      %s139 = sphi 0, %s141
      %s142 = sphi 0, %s139
      %s143 = sphi 0, %s142
      %s159 = sphi 0, %s143
    $region4: #{tpu_custom_call.1} parent=1 // loop_header_branch
      %17 = sbr.rel (%p15) target = $region8
    $region5: #{tpu_custom_call.1} parent=1 // loop_body
      %s19 = ssub.s32 %s14, 1
      %s20 = ssub.s32 %s14, 2
      %s21 = sadd.s32 %s14, 1
      %s22 = ssub.s32 %s14, %s21
      %p23 = scmp.eq.s32.totalorder %s22, 0
      %s25 = sadd.s32 %s24, 1
      %s26 = scalar_select %p23, %s24, %s25
      %p29 = pneg %p23
      %p30 = scmp.eq.s32.totalorder %s14, 1
      %p31 = por %p29, %p30
      %p32 = scmp.ne.s32.totalorder %s24, %s27
      %p33 = scmp.eq.s32.totalorder %s14, 0
      %p34 = por %p32, %p33
      %p35 = scmp.ne.s32.totalorder %s24, %s27
      %p36 = scmp.eq.s32.totalorder %s19, 1
      %p37 = por %p35, %p36
      %p38 = scmp.ne.s32.totalorder %s27, %s28
      %p39 = scmp.eq.s32.totalorder %s19, 0
      %p40 = por %p38, %p39
      %p41 = scmp.ne.s32.totalorder %s27, %s28
      %p42 = scmp.eq.s32.totalorder %s20, 1
      %p43 = por %p41, %p42
      %p45 = scmp.ne.s32.totalorder %s28, %s44
      %p46 = scmp.eq.s32.totalorder %s20, 0
      %p47 = por %p45, %p46
      %s48 = ssub.s32 %s14, %s21
      %p49 = scmp.eq.s32.totalorder %s48, 0
      %s51 = sadd.s32 %s50, 1
      %s52 = scalar_select %p49, %s50, %s51
      %p55 = pneg %p49
      %p56 = scmp.eq.s32.totalorder %s14, 1
      %p57 = por %p55, %p56
      %p58 = scmp.ne.s32.totalorder %s50, %s53
      %p59 = scmp.eq.s32.totalorder %s14, 0
      %p60 = por %p58, %p59
      %p61 = scmp.ne.s32.totalorder %s50, %s53
      %p62 = scmp.eq.s32.totalorder %s19, 1
      %p63 = por %p61, %p62
      %p64 = scmp.ne.s32.totalorder %s53, %s54
      %p65 = scmp.eq.s32.totalorder %s19, 0
      %p66 = por %p64, %p65
      %p67 = scmp.ne.s32.totalorder %s53, %s54
      %p68 = scmp.eq.s32.totalorder %s20, 1
      %p69 = por %p67, %p68
      %p71 = scmp.ne.s32.totalorder %s54, %s70
      %p72 = scmp.eq.s32.totalorder %s20, 0
      %p73 = por %p71, %p72
      %s75 = sadd.s32 %s74, 1
      %p78 = scmp.eq.s32.totalorder %s14, 1
      %p79 = scmp.ne.s32.totalorder %s74, %s76
      %p80 = scmp.eq.s32.totalorder %s14, 0
      %p81 = por %p79, %p80
      %p82 = scmp.ne.s32.totalorder %s74, %s76
      %p83 = scmp.eq.s32.totalorder %s19, 1
      %p84 = por %p82, %p83
      %p85 = scmp.ne.s32.totalorder %s76, %s77
      %p86 = scmp.eq.s32.totalorder %s19, 0
      %p87 = por %p85, %p86
      %p88 = scmp.ne.s32.totalorder %s76, %s77
      %p89 = scmp.eq.s32.totalorder %s20, 1
      %p90 = por %p88, %p89
      %p92 = scmp.ne.s32.totalorder %s77, %s91
      %p93 = scmp.eq.s32.totalorder %s20, 0
      %p94 = por %p92, %p93
      %s96 = sadd.s32 %s95, 1
      %p99 = scmp.eq.s32.totalorder %s14, 1
      %p100 = scmp.ne.s32.totalorder %s95, %s97
      %p101 = scmp.eq.s32.totalorder %s14, 0
      %p102 = por %p100, %p101
      %p103 = scmp.ne.s32.totalorder %s95, %s97
      %p104 = scmp.eq.s32.totalorder %s19, 1
      %p105 = por %p103, %p104
      %p106 = scmp.ne.s32.totalorder %s97, %s98
      %p107 = scmp.eq.s32.totalorder %s19, 0
      %p108 = por %p106, %p107
      %p109 = scmp.ne.s32.totalorder %s97, %s98
      %p110 = scmp.eq.s32.totalorder %s20, 1
      %p111 = por %p109, %p110
      %p113 = scmp.ne.s32.totalorder %s98, %s112
      %p114 = scmp.eq.s32.totalorder %s20, 0
      %p115 = por %p113, %p114
      %s117 = sadd.s32 %s116, 1
      %p120 = scmp.eq.s32.totalorder %s14, 1
      %p121 = scmp.ne.s32.totalorder %s116, %s118
      %p122 = scmp.eq.s32.totalorder %s14, 0
      %p123 = por %p121, %p122
      %p124 = scmp.ne.s32.totalorder %s116, %s118
      %p125 = scmp.eq.s32.totalorder %s19, 1
      %p126 = por %p124, %p125
      %p127 = scmp.ne.s32.totalorder %s118, %s119
      %p128 = scmp.eq.s32.totalorder %s19, 0
      %p129 = por %p127, %p128
      %p130 = scmp.ne.s32.totalorder %s118, %s119
      %p131 = scmp.eq.s32.totalorder %s20, 1
      %p132 = por %p130, %p131
      %p134 = scmp.ne.s32.totalorder %s119, %s133
      %p135 = scmp.eq.s32.totalorder %s20, 0
      %p136 = por %p134, %p135
      %s137 = ssub.s32 %s14, %s21
      %p138 = scmp.eq.s32.totalorder %s137, 0
      %s140 = sadd.s32 %s139, 1
      %s141 = scalar_select %p138, %s139, %s140
      %p144 = pneg %p138
      %p145 = scmp.eq.s32.totalorder %s14, 1
      %p146 = por %p144, %p145
      %p147 = scmp.ne.s32.totalorder %s139, %s142
      %p148 = scmp.eq.s32.totalorder %s14, 0
      %p149 = por %p147, %p148
      %p150 = scmp.ne.s32.totalorder %s139, %s142
      %p151 = scmp.eq.s32.totalorder %s19, 1
      %p152 = por %p150, %p151
      %p153 = scmp.ne.s32.totalorder %s142, %s143
      %p154 = scmp.eq.s32.totalorder %s19, 0
      %p155 = por %p153, %p154
      %p156 = scmp.ne.s32.totalorder %s142, %s143
      %p157 = scmp.eq.s32.totalorder %s20, 1
      %p158 = por %p156, %p157
      %p160 = scmp.ne.s32.totalorder %s143, %s159
      %p161 = scmp.eq.s32.totalorder %s20, 0
      %p162 = por %p160, %p161
      %p163 = scmp.le.s32.totalorder 1, %s14
      %p164 = scmp.lt.s32.totalorder %s14, 3
      %p165 = pnand %p163, %p164
      %p166 = pneg %p165
      // Predicated region
      $region9: #{tpu_custom_call.1} parent=5 // pred_check
        _
      $region10: #{tpu_custom_call.1} parent=5 // pred_check_branch
        %168 = sbr.rel (%p165) target = $region12
      $region11: #{tpu_custom_call.1} parent=5 // pred_region
        %s169 = ssub.s32 %s14, 1
        // Predicated region
        $region13: #{tpu_custom_call.1} parent=11 // pred_check
          %p170 = pneg %p87
        $region14: #{tpu_custom_call.1} parent=11 // pred_check_branch
          %172 = sbr.rel (%p170) target = $region16
        $region15: #{tpu_custom_call.1} parent=11 // pred_region
          _
        $region16: #{tpu_custom_call.1} parent=11 // pred_fallthru
          _
        // Predicated region
        $region17: #{tpu_custom_call.1} parent=11 // pred_check
          %p173 = pneg %p108
        $region18: #{tpu_custom_call.1} parent=11 // pred_check_branch
          %175 = sbr.rel (%p173) target = $region20
        $region19: #{tpu_custom_call.1} parent=11 // pred_region
          _
        $region20: #{tpu_custom_call.1} parent=11 // pred_fallthru
          _
        // Predicated region
        $region21: #{tpu_custom_call.1} parent=11 // pred_check
          %p176 = pneg %p129
        $region22: #{tpu_custom_call.1} parent=11 // pred_check_branch
          %178 = sbr.rel (%p176) target = $region24
        $region23: #{tpu_custom_call.1} parent=11 // pred_region
          _
        $region24: #{tpu_custom_call.1} parent=11 // pred_fallthru
          _
      $region12: #{tpu_custom_call.1} parent=5 // pred_fallthru
        _
      %p179 = scmp.lt.s32.totalorder %s14, 2
      // Predicated region
      $region25: #{tpu_custom_call.1} parent=5 // pred_check
        %p180 = pneg %p179
      $region26: #{tpu_custom_call.1} parent=5 // pred_check_branch
        %182 = sbr.rel (%p180) target = $region28
      $region27: #{tpu_custom_call.1} parent=5 // pred_region
        // Predicated region
        $region29: #{tpu_custom_call.1} parent=27 // pred_check
          %p183 = pneg %p34
        $region30: #{tpu_custom_call.1} parent=27 // pred_check_branch
          %185 = sbr.rel (%p183) target = $region32
        $region31: #{tpu_custom_call.1} parent=27 // pred_region
          %p186 = scmp.lt.s32.totalorder %s14, 1
          %s187 = scalar_select %p186, %s14, 1
          %s188 = smul.addr %s187, 8
          %s189 = scalar_lea.vmem %s0, %s188
        $region32: #{tpu_custom_call.1} parent=27 // pred_fallthru
          _
        // Predicated region
        $region33: #{tpu_custom_call.1} parent=27 // pred_check
          %p190 = pneg %p60
        $region34: #{tpu_custom_call.1} parent=27 // pred_check_branch
          %192 = sbr.rel (%p190) target = $region36
        $region35: #{tpu_custom_call.1} parent=27 // pred_region
          %p193 = scmp.lt.s32.totalorder %s14, 1
          %s194 = scalar_select %p193, %s14, 1
          %s195 = smul.addr %s194, 8
          %s196 = scalar_lea.vmem %s1, %s195
        $region36: #{tpu_custom_call.1} parent=27 // pred_fallthru
          _
      $region28: #{tpu_custom_call.1} parent=5 // pred_fallthru
        _
      %p197 = scmp.le.s32.totalorder 1, %s14
      %p198 = scmp.lt.s32.totalorder %s14, 3
      %p199 = pnand %p197, %p198
      %p200 = pneg %p199
      // Predicated region
      $region37: #{tpu_custom_call.1} parent=5 // pred_check
        _
      $region38: #{tpu_custom_call.1} parent=5 // pred_check_branch
        %202 = sbr.rel (%p199) target = $region40
      $region39: #{tpu_custom_call.1} parent=5 // pred_region
        %s203 = ssub.s32 %s14, 1
        %p204 = scmp.lt.s32.totalorder %s19, 1
        %s205 = scalar_select %p204, %s19, 1
        %s206 = smul.addr %s205, 8
        %s207 = scalar_lea.vmem %s0, %s206
        %p208 = pneg %p40
        %p209 = pneg %p37
        %p210 = scmp.lt.s32.totalorder %s19, 1
        %s211 = scalar_select %p210, %s19, 1
        %s212 = smul.addr %s211, 8
        %s213 = scalar_lea.vmem %s1, %s212
        %p214 = pneg %p66
        %p215 = pneg %p63
        %p216 = pneg %p87
        %p217 = pneg %p84
        %p218 = pneg %p108
        %p219 = pneg %p105
        %p220 = pneg %p129
        %p221 = pneg %p126
        %p222 = pneg %p155
        %p223 = pneg %p152
        %s224 = sand.u32 %s142, 1
        %s225 = scalar_lea.sflag [#allocation3], %s224
        %s226 = sand.u32 %s142, 1
        %s227 = smul.addr %s226, 8
        %s228 = scalar_lea.vmem [#allocation2], %s227
        %p229 = scmp.lt.s32.totalorder %s19, 1
        %s230 = scalar_select %p229, %s19, 1
        %s231 = smul.addr %s230, 8
        %s232 = scalar_lea.vmem %s0, %s231
        %p233 = scmp.lt.s32.totalorder %s19, 1
        %s234 = scalar_select %p233, %s19, 1
        %s235 = smul.addr %s234, 8
        %s236 = scalar_lea.vmem %s1, %s235
        %v237 = vld [vmem:[%s232] sm:$0xff]
        %v238 = vld [vmem:[%s2] sm:$0xf]
        %v239 = vld [vmem:[%s236] sm:$0xff]
        %v240 = vld [vmem:[%s3] sm:$0x1]
        %242 = vset.pattern.permute.xlu0 0
        %243 = vperm.xlu0 %242, %v239
        %v244 = vpop.permute.xlu0 %243
        %v247 = vperm.slane %v240, 0
        %v249 = vmul.f32 %v244, %v247
        %vm250 = vcmask 31744
        %v252 = vsel %vm250, %v237, 0
        %vm254 = vcmask 1043456
        %v256 = vsel %vm254, %v238, 0
        %258 = vmatpush.msra.mxu0 0.0
        %259 = vmatpush.msra.mxu0 0.0
        %260 = vmatpush.msra.mxu0 0.0
        %261 = vmatpush.msra.mxu0 0.0
        %262 = vmatpush.msra.mxu0 0.0
        %263 = vmatpush.msra.mxu0 0.0
        %264 = vmatpush.msra.mxu0 0.0
        %265 = vmatpush.msra.mxu0 0.0
        %266 = vmatpush.msra.mxu0 0.0
        %267 = vmatpush.msra.mxu0 0.0
        %268 = vmatpush.msra.mxu0 0.0
        %269 = vmatpush.msra.mxu0 0.0
        %270 = vmatpush.msra.mxu0 0.0
        %271 = vmatpush.msra.mxu0 0.0
        %272 = vmatpush.msra.mxu0 0.0
        %273 = vmatpush.msra.mxu0 %v256
        %274 = vmatmul.f32.gmra.mxu0 %v252
        %v275 = vpop.f32.mrf.mxu0
        %v276 = vadd.f32 %v249, %v275
        %277 = vdwg.mxu0
        %v278 = vld [vmem:[%s4] sm:$0x1]
        %v280 = vperm.slane %v278, 0
        %v282 = vadd.f32 %v276, %v280
        %vm283 = vcmask 261120
        %284 = vst.msk [vmem:[%s228] sm:$0xff] %vm283, %v282
        %s285 = sand.u32 %s142, 1
        %s286 = scalar_lea.sflag [#allocation3], %s285
        %s287 = sand.u32 %s142, 1
        %s288 = smul.addr %s287, 8
        %s289 = scalar_lea.vmem [#allocation2], %s288
        // Predicated region
        $region41: #{tpu_custom_call.1} parent=39 // pred_check
          %p290 = pneg %p152
        $region42: #{tpu_custom_call.1} parent=39 // pred_check_branch
          %292 = sbr.rel (%p290) target = $region44
        $region43: #{tpu_custom_call.1} parent=39 // pred_region
          %294 = vsyncadd %s286, 0
          %s295 = smul.addr %s19, 8
          %s296 = scalar_lea.hbm %s5, %s295
          %s298 = sshll.u32 %s289, 4
          %s299 = int_to_ptr.vmem [resolvable:$true] %s298
          %s300 = sshll.u32 %s296, 4
          %s301 = int_to_ptr.hbm [resolvable:$true] %s300
          %303 = dma.vmem_to_hbm [thread:$0]  %s299, 128, %s301, %s286
        $region44: #{tpu_custom_call.1} parent=39 // pred_fallthru
          _
      $region40: #{tpu_custom_call.1} parent=5 // pred_fallthru
        _
      %p304 = scmp.le.s32.totalorder 2, %s14
      // Predicated region
      $region45: #{tpu_custom_call.1} parent=5 // pred_check
        %p305 = pneg %p304
      $region46: #{tpu_custom_call.1} parent=5 // pred_check_branch
        %307 = sbr.rel (%p305) target = $region48
      $region47: #{tpu_custom_call.1} parent=5 // pred_region
        %s308 = ssub.s32 %s14, 2
        // Predicated region
        $region49: #{tpu_custom_call.1} parent=47 // pred_check
          %p309 = pneg %p158
        $region50: #{tpu_custom_call.1} parent=47 // pred_check_branch
          %311 = sbr.rel (%p309) target = $region52
        $region51: #{tpu_custom_call.1} parent=47 // pred_region
          %s312 = sand.u32 %s143, 1
          %s313 = scalar_lea.sflag [#allocation3], %s312
          %s314 = sand.u32 %s143, 1
          %s315 = smul.addr %s314, 8
          %s316 = scalar_lea.vmem [#allocation2], %s315
          %318 = dma.done %s313, 128
        $region52: #{tpu_custom_call.1} parent=47 // pred_fallthru
          _
      $region48: #{tpu_custom_call.1} parent=5 // pred_fallthru
        _
    $region6: #{tpu_custom_call.1} parent=1 // loop_footer
      %s18 = sadd.s32 1, %s14
    $region7: #{tpu_custom_call.1} parent=1 // loop_footer_branch
      %13 = sbr.rel target = $region3
    $region8: #{tpu_custom_call.1} parent=1 // loop_exit
      _
    %319 = vsyncpa [#allocation3], 1
    %s320 = scalar_lea.sflag [#allocation3], 1
    %321 = vsyncpa %s320, 1

</llo_original>
